<compile_context>
chip_gen: v7x
topology: tpu7x:2x2x1
jax: 0.10.0
libtpu: 0.0.40
codegen_flags: <defaults>
</compile_context>

<pallas_src>
import math
import jax
import jax.numpy as jnp
from jax import lax
from jax.experimental import pallas as pl
from jax.experimental.pallas import tpu as pltpu

MiB = 1024 * 1024


# ------------------------------ small helpers ---------------------------------
def _default_vmem_limit():
    """~75% of physical VMEM, capped at 100 MiB (v5e/v6e -> 96 MiB, v7x -> 48 MiB)."""
    try:
        cap = int(pltpu.get_tpu_info().vmem_capacity_bytes)
    except Exception:
        cap = 64 * MiB  # conservative fallback, fits every generation
    return int(min(cap * 3 // 4, 100 * MiB))


def _single_buffered(block_shape, index_map):
    """BlockSpec for a grid-invariant operand: single VMEM buffer (no double-buffering)."""
    try:
        return pl.BlockSpec(block_shape, index_map, pipeline_mode=pl.Buffered(1))
    except (TypeError, AttributeError):  # older API without pipeline_mode
        return pl.BlockSpec(block_shape, index_map)


def _pick_time_chunk(T, Bs, H, out_cols, out_bytes, fuse_fc, vmem_limit):
    """Largest time chunk whose double-buffered tiles fit ~half the VMEM budget.
    Prefers a chunk that divides T (no wrapper-side pad/slice HBM pass)."""
    budget = vmem_limit // 2
    fixed = H * (4 * H) * 2 + 2 * Bs * H * 4            # W_hh (bf16, 1 buffer) + h/c scratch
    if fuse_fc:
        fixed += H * out_cols * 2 + out_cols * 4         # fc weight (bf16) + bias
    per_t = 2 * Bs * (4 * H) * 4 + 2 * Bs * out_cols * out_bytes   # gx + out, double-buffered
    cap = (budget - fixed) // max(per_t, 1)
    cap = int(max(8, min(128, cap)))
    cap = max(1, min(cap, T))
    if T % cap == 0:
        return cap, False
    best = 1
    for d in range(1, cap + 1):
        if T % d == 0:
            best = d
    if best * 4 >= cap:          # close enough to the budgeted chunk: avoid padding
        return best, False
    return cap, True             # fall back to a padded tail


# ---------------- phase 1: sequence-wide input projection (X @ W_ih^T + b) ----------------
def matmul_bias_kernel(x_ref, w_ref, b_ref, o_ref):
    acc = jnp.dot(x_ref[...].astype(jnp.bfloat16), w_ref[...],
                  preferred_element_type=jnp.float32)
    o_ref[...] = (acc + b_ref[...]).astype(o_ref.dtype)


def matmul_bias(x2d, w_t_bf16, b, *, tm_max=512, tn_max=1024, vmem_limit=None):
    M, D = x2d.shape
    N = w_t_bf16.shape[1]
    if vmem_limit is None:
        vmem_limit = _default_vmem_limit()
    tm = min(tm_max, M)
    tn = N if N <= tn_max else tn_max          # tn_max is a multiple of 128
    grid_m = pl.cdiv(M, tm)
    grid_n = pl.cdiv(N, tn)
    # weight/bias are grid-invariant when grid_n == 1 -> single-buffer them
    make_w = _single_buffered if grid_n == 1 else pl.BlockSpec
    return pl.pallas_call(
        matmul_bias_kernel,
        out_shape=jax.ShapeDtypeStruct((M, N), jnp.float32),
        grid_spec=pltpu.PrefetchScalarGridSpec(
            num_scalar_prefetch=0,
            grid=(grid_n, grid_m),                       # weight changes only on outer axis
            in_specs=[
                pl.BlockSpec((tm, D), lambda j, i: (i, 0)),     # activations (row tiles)
                make_w((D, tn), lambda j, i: (0, j)),           # W_ih^T column tile (bf16)
                make_w((1, tn), lambda j, i: (0, j)),           # b_ih + b_hh (folded once)
            ],
            out_specs=pl.BlockSpec((tm, tn), lambda j, i: (i, j)),
        ),
        compiler_params=pltpu.CompilerParams(
            dimension_semantics=("parallel", "parallel"),
            vmem_limit_bytes=int(vmem_limit)),
    )(x2d, w_t_bf16, b)


# ---------------- phase 2: recurrence over (batch shard, time chunk) ----------------
def _make_lstm_kernel(H, TT, fuse_fc, split_gates):
    def cell_update(gx_t, h, c, whh):
        hb = h.astype(jnp.bfloat16)                      # bf16 MXU operand, f32 state kept
        if split_gates:
            # per-gate dots keep the live set small (avoids vreg spills at large H)
            def gate(k):
                return gx_t[:, k * H:(k + 1) * H] + jnp.dot(
                    hb, whh[:, k * H:(k + 1) * H], preferred_element_type=jnp.float32)
            i_g = jax.nn.sigmoid(gate(0))
            f_g = jax.nn.sigmoid(gate(1))
            g_g = jnp.tanh(gate(2))
            o_g = jax.nn.sigmoid(gate(3))
        else:
            gates = gx_t + jnp.dot(hb, whh, preferred_element_type=jnp.float32)
            i_g = jax.nn.sigmoid(gates[:, 0 * H:1 * H])
            f_g = jax.nn.sigmoid(gates[:, 1 * H:2 * H])
            g_g = jnp.tanh(gates[:, 2 * H:3 * H])
            o_g = jax.nn.sigmoid(gates[:, 3 * H:4 * H])
        c_new = f_g * c + i_g * g_g
        h_new = o_g * jnp.tanh(c_new)
        return h_new, c_new

    if fuse_fc:
        def kernel(gx_ref, whh_ref, fcw_ref, fcb_ref, out_ref, h_scr, c_scr):
            @pl.when(pl.program_id(1) == 0)              # reset state at t=0 of each shard
            def _():
                h_scr[...] = jnp.zeros_like(h_scr)
                c_scr[...] = jnp.zeros_like(c_scr)

            whh = whh_ref[...]                           # (H, 4H) bf16, hoisted
            fcw = fcw_ref[...]                           # (H, O)  bf16, hoisted
            fcb = fcb_ref[...]                           # (1, O)  f32

            def step(t, carry):
                h_new, c_new = cell_update(gx_ref[t], h_scr[...], c_scr[...], whh)
                h_scr[...] = h_new
                c_scr[...] = c_new
                # fused FC + sigmoid: off the recurrent critical path, no HBM round trip
                y = jnp.dot(h_new.astype(jnp.bfloat16), fcw,
                            preferred_element_type=jnp.float32) + fcb
                out_ref[t] = jax.nn.sigmoid(y).astype(out_ref.dtype)
                return carry

            lax.fori_loop(0, TT, step, 0, unroll=2)
        return kernel

    def kernel(gx_ref, whh_ref, out_ref, h_scr, c_scr):
        @pl.when(pl.program_id(1) == 0)
        def _():
            h_scr[...] = jnp.zeros_like(h_scr)
            c_scr[...] = jnp.zeros_like(c_scr)

        whh = whh_ref[...]

        def step(t, carry):
            h_new, c_new = cell_update(gx_ref[t], h_scr[...], c_scr[...], whh)
            h_scr[...] = h_new
            c_scr[...] = c_new
            out_ref[t] = h_new.astype(out_ref.dtype)     # bf16 for intermediate layers
            return carry

        lax.fori_loop(0, TT, step, 0, unroll=2)
    return kernel


def lstm_recurrence(gx, w_hh_bf16, *, fc_w_bf16=None, fc_b=None,
                    out_dtype=jnp.float32, vmem_limit=None):
    # gx: (T, B, 4H) time-major pre-projected gates (f32).
    # Returns (T, B, H) hidden states, or (T, B, O) logits when fc_w_bf16 is given.
    T, B, G = gx.shape
    H = w_hh_bf16.shape[0]
    fuse_fc = fc_w_bf16 is not None
    out_cols = fc_w_bf16.shape[1] if fuse_fc else H
    if vmem_limit is None:
        vmem_limit = _default_vmem_limit()

    # v7x has 2 TensorCores: shard the batch when each half stays sublane-aligned.
    n_shards = 2 if (B % 2 == 0 and (B // 2) % 8 == 0) else 1
    Bs = B // n_shards

    out_bytes = jnp.dtype(out_dtype).itemsize
    tt, pad = _pick_time_chunk(T, Bs, H, out_cols, out_bytes, fuse_fc, vmem_limit)
    n_chunks = pl.cdiv(T, tt)
    Tp = n_chunks * tt
    if pad and Tp != T:
        # zero-padded tail steps run after all valid steps; their outputs are sliced off
        gx = jnp.pad(gx, ((0, Tp - T), (0, 0), (0, 0)))

    kernel = _make_lstm_kernel(H, tt, fuse_fc, split_gates=(H >= 512))

    in_specs = [
        pl.BlockSpec((tt, Bs, G), lambda s, c: (c, s, 0)),          # gates_x time chunk
        _single_buffered((H, G), lambda s, c: (0, 0)),              # W_hh^T (grid-invariant)
    ]
    args = [gx, w_hh_bf16]
    if fuse_fc:
        in_specs += [
            _single_buffered((H, out_cols), lambda s, c: (0, 0)),   # fc weight
            _single_buffered((1, out_cols), lambda s, c: (0, 0)),   # fc bias
        ]
        args += [fc_w_bf16, fc_b]

    out = pl.pallas_call(
        kernel,
        out_shape=jax.ShapeDtypeStruct((Tp, B, out_cols), out_dtype),
        grid_spec=pltpu.PrefetchScalarGridSpec(
            num_scalar_prefetch=0,
            grid=(n_shards, n_chunks),                              # time innermost per shard
            in_specs=in_specs,
            out_specs=pl.BlockSpec((tt, Bs, out_cols), lambda s, c: (c, s, 0)),
            scratch_shapes=[pltpu.VMEM((Bs, H), jnp.float32),       # h state (persists)
                            pltpu.VMEM((Bs, H), jnp.float32)],      # c state (persists)
        ),
        compiler_params=pltpu.CompilerParams(
            dimension_semantics=("parallel", "arbitrary"),
            vmem_limit_bytes=int(vmem_limit)),
    )(*args)
    return out[:T] if Tp != T else out


# ------------------------------- model wrapper --------------------------------
def rnn_forward(x, params):
    B, T, _ = x.shape
    vmem_limit = _default_vmem_limit()
    h = jnp.transpose(x, (1, 0, 2))                     # (T, B, D) time-major
    n_layers = len(params["lstm"])
    fc_w_bf16 = params["fc_w_t"].astype(jnp.bfloat16)   # pre-cast once
    fc_b = params["fc_b"]
    for li, (w_ih_t, w_hh_t, b) in enumerate(params["lstm"]):
        d_in = w_ih_t.shape[0]
        H = w_hh_t.shape[0]
        gx = matmul_bias(h.reshape(T * B, d_in), w_ih_t.astype(jnp.bfloat16), b,
                         vmem_limit=vmem_limit)                          # (T*B, 4H) f32
        gx = gx.reshape(T, B, 4 * H)
        if li == n_layers - 1:
            y = lstm_recurrence(gx, w_hh_t.astype(jnp.bfloat16),
                                fc_w_bf16=fc_w_bf16, fc_b=fc_b,
                                out_dtype=jnp.float32, vmem_limit=vmem_limit)  # (T, B, O)
            return jnp.transpose(y, (1, 0, 2))                                 # (B, T, O)
        h = lstm_recurrence(gx, w_hh_t.astype(jnp.bfloat16),
                            out_dtype=jnp.bfloat16, vmem_limit=vmem_limit)     # (T, B, H)
    raise ValueError("num_layer must be >= 1")


def init_params(key, input_dim, hidden_dim, output_dim, num_layer):
    # Matches PyTorch default init: uniform(-1/sqrt(H), 1/sqrt(H)) for LSTM,
    # uniform(-1/sqrt(fan_in), 1/sqrt(fan_in)) for Linear. Deterministic via key.
    params = {"lstm": []}
    k_lstm = 1.0 / math.sqrt(hidden_dim)
    for layer in range(num_layer):
        d_in = input_dim if layer == 0 else hidden_dim
        key, k1, k2, k3, k4 = jax.random.split(key, 5)
        w_ih = jax.random.uniform(k1, (4 * hidden_dim, d_in),
                                  minval=-k_lstm, maxval=k_lstm, dtype=jnp.float32)
        w_hh = jax.random.uniform(k2, (4 * hidden_dim, hidden_dim),
                                  minval=-k_lstm, maxval=k_lstm, dtype=jnp.float32)
        b_ih = jax.random.uniform(k3, (4 * hidden_dim,),
                                  minval=-k_lstm, maxval=k_lstm, dtype=jnp.float32)
        b_hh = jax.random.uniform(k4, (4 * hidden_dim,),
                                  minval=-k_lstm, maxval=k_lstm, dtype=jnp.float32)
        params["lstm"].append((w_ih.T, w_hh.T, (b_ih + b_hh).reshape(1, -1)))
    k_fc = 1.0 / math.sqrt(hidden_dim)
    key, k1, k2 = jax.random.split(key, 3)
    fc_w = jax.random.uniform(k1, (output_dim, hidden_dim),
                              minval=-k_fc, maxval=k_fc, dtype=jnp.float32)
    fc_b = jax.random.uniform(k2, (output_dim,),
                              minval=-k_fc, maxval=k_fc, dtype=jnp.float32)
    params["fc_w_t"] = fc_w.T
    params["fc_b"] = fc_b.reshape(1, -1)
    return params


# ------------------------------ pure-JAX reference ----------------------------
def rnn_forward_ref(x, params):
    h_seq = x
    for (w_ih_t, w_hh_t, b) in params["lstm"]:
        B, T, _ = h_seq.shape
        H = w_hh_t.shape[0]

        def step(carry, x_t):
            h, c = carry
            gates = x_t @ w_ih_t + h @ w_hh_t + b
            i_g = jax.nn.sigmoid(gates[:, 0 * H:1 * H])
            f_g = jax.nn.sigmoid(gates[:, 1 * H:2 * H])
            g_g = jnp.tanh(gates[:, 2 * H:3 * H])
            o_g = jax.nn.sigmoid(gates[:, 3 * H:4 * H])
            c_new = f_g * c + i_g * g_g
            h_new = o_g * jnp.tanh(c_new)
            return (h_new, c_new), h_new

        init = (jnp.zeros((B, H), jnp.float32), jnp.zeros((B, H), jnp.float32))
        _, hs = jax.lax.scan(step, init, jnp.swapaxes(h_seq, 0, 1))
        h_seq = jnp.swapaxes(hs, 0, 1)
    y = h_seq @ params["fc_w_t"] + params["fc_b"]
    return jax.nn.sigmoid(y)


if __name__ == "__main__":
    B, T = 2, 8
    input_dim, hidden_dim, output_dim, num_layer = 16, 32, 4, 2

    key = jax.random.PRNGKey(0)
    key, kx = jax.random.split(key)
    x = jax.random.normal(kx, (B, T, input_dim), dtype=jnp.float32)
    params = init_params(key, input_dim, hidden_dim, output_dim, num_layer)

    out = jax.block_until_ready(rnn_forward(x, params))
    assert out.shape == (B, T, output_dim), out.shape

    ref = jax.block_until_ready(rnn_forward_ref(x, params))
    max_diff = float(jnp.max(jnp.abs(out - ref)))
    # bf16 MXU operands (f32 accumulation) vs. the pure-f32 reference: small extra slack.
    assert max_diff < 2e-3, f"mismatch vs reference: {max_diff}"

    print("KERNEL_OK")
</pallas_src>

<mosaic_0001>
module attributes {stable_mosaic.version = 11 : i64} {
  func.func @matmul_bias_kernel(%arg0: i32, %arg1: i32, %arg2: memref<16x16xf32, #tpu.memory_space<vmem>>, %arg3: memref<16x128xbf16, #tpu.memory_space<vmem>>, %arg4: memref<1x128xf32, #tpu.memory_space<vmem>>, %arg5: memref<16x128xf32, #tpu.memory_space<vmem>>) attributes {dimension_semantics = [#tpu.dimension_semantics<parallel>, #tpu.dimension_semantics<parallel>], iteration_bounds = array<i64: 1, 1>, scalar_prefetch = 0 : i64, scratch_operands = 0 : i64, tpu.core_type = #tpu.core_type<tc>, window_params = [{transform_indices = @transform_0, window_bounds = array<i64: 16, 16>}, {pipeline_mode = #tpu.pipeline_mode<synchronous>, transform_indices = @transform_1, window_bounds = array<i64: 16, 128>}, {pipeline_mode = #tpu.pipeline_mode<synchronous>, transform_indices = @transform_2, window_bounds = array<i64: 1, 128>}, {transform_indices = @transform_3, window_bounds = array<i64: 16, 128>}]} {
    %c0 = arith.constant 0 : index
    %c0_0 = arith.constant 0 : index
    %0 = vector.load %arg2[%c0, %c0_0] : memref<16x16xf32, #tpu.memory_space<vmem>>, vector<16x16xf32>
    %1 = arith.truncf %0 : vector<16x16xf32> to vector<16x16xbf16>
    %c0_1 = arith.constant 0 : index
    %c0_2 = arith.constant 0 : index
    %2 = vector.load %arg3[%c0_1, %c0_2] : memref<16x128xbf16, #tpu.memory_space<vmem>>, vector<16x128xbf16>
    %cst = arith.constant dense<0.000000e+00> : vector<16x128xf32>
    %3 = tpu.matmul %1, %2, %cst {dimension_numbers = #tpu.dot_dimension_numbers<[1], [0], [0], [1], [0, 0, 1, 1], [], []>} : vector<16x16xbf16>, vector<16x128xbf16>, vector<16x128xf32> -> vector<16x128xf32>
    %c0_3 = arith.constant 0 : index
    %c0_4 = arith.constant 0 : index
    %4 = vector.load %arg4[%c0_3, %c0_4] : memref<1x128xf32, #tpu.memory_space<vmem>>, vector<1x128xf32>
    %5 = vector.broadcast %4 : vector<1x128xf32> to vector<16x128xf32>
    %6 = arith.addf %3, %5 : vector<16x128xf32>
    %c0_5 = arith.constant 0 : index
    %c0_6 = arith.constant 0 : index
    %7 = vector.load %arg5[%c0_5, %c0_6] : memref<16x128xf32, #tpu.memory_space<vmem>>, vector<16x128xf32>
    tpu.vector_store %arg5[%c0_5, %c0_6], %6 {strides = array<i32>} : memref<16x128xf32, #tpu.memory_space<vmem>>, vector<16x128xf32>,
    return
  }
  func.func @transform_0(%arg0: i32, %arg1: i32) -> (i32, i32) {
    %c0_i32 = arith.constant 0 : i32
    %c0_i32_0 = arith.constant 0 : i32
    return %arg1, %c0_i32 : i32, i32
  }
  func.func @transform_1(%arg0: i32, %arg1: i32) -> (i32, i32) {
    %c0_i32 = arith.constant 0 : i32
    %c0_i32_0 = arith.constant 0 : i32
    return %c0_i32, %arg0 : i32, i32
  }
  func.func @transform_2(%arg0: i32, %arg1: i32) -> (i32, i32) {
    %c0_i32 = arith.constant 0 : i32
    %c0_i32_0 = arith.constant 0 : i32
    return %c0_i32, %arg0 : i32, i32
  }
  func.func @transform_3(%arg0: i32, %arg1: i32) -> (i32, i32) {
    %c0_i32 = arith.constant 0 : i32
    return %arg1, %arg0 : i32, i32
  }
}

</mosaic_0001>

<llo_original>
// kernel: tpu_custom_call.1
$region0: #{tpu_custom_call.1}
  #allocation0 [shape = 'u32[]', space=smem, size = 0x4, offset = 0x4, fixed_abs, tag = 'smem constant byte address 0x4 - core index']
  #allocation1 [shape = 'u32[144,128]{1,0:T(1,128)}', space=vmem, size = 0x12000, scoped, tag = 'internal scratch']
  %s0 = inlined_call_operand.hbm [shape: f32[16,16], index: 0, kind: input, shape index: {}]
  %s1 = inlined_call_operand.hbm [shape: bf16[16,128], index: 1, kind: input, shape index: {}]
  %s2 = inlined_call_operand.vmem [shape: f32[1,128], index: 2, kind: input, shape index: {}]
  %s3 = inlined_call_operand.hbm [shape: f32[16,128], index: 3, kind: output, shape index: {}]
  %s4 = sld [smem:[#allocation0]]
  $region30: #{tpu_custom_call.1} parent=0
    _
  %s6 = ssub.s32 1, %s4
  %s7 = scalar_select 0, %s6, %s4
  $region1: #{tpu_custom_call.1} parent=0
    #allocation2 [shape = 'u8[8192]{0}', space=vmem, size = 0x2000, scoped, tag = 'input window, operand 0, single buffered']
    #allocation3 [shape = 's32[1]{0}', space=sflag, size = 0x4, scoped, tag = 'scoped memory for tpu_custom_call.1']
    #allocation4 [shape = 's32[1]{0}', space=sflag, size = 0x4, scoped, tag = 'scoped memory for tpu_custom_call.1']
    #allocation5 [shape = 'u8[4096]{0}', space=vmem, size = 0x1000, scoped, tag = 'input window, operand 1, single buffered']
    #allocation6 [shape = 's32[1]{0}', space=sflag, size = 0x4, scoped, tag = 'scoped memory for tpu_custom_call.1']
    #allocation7 [shape = 'u8[8192]{0}', space=vmem, size = 0x2000, scoped, tag = 'output window, operand 0, single buffered']
    %8 = vsyncpa [#allocation3], 0
    %9 = vsyncpa [#allocation6], 0
    %10 = vsyncpa [#allocation4], 0
    // Predicated region
    $region2: #{tpu_custom_call.1} parent=1 // pred_check
      _
    $region3: #{tpu_custom_call.1} parent=1 // pred_check_branch
      %12 = sbr.rel (0) target = $region5
    $region4: #{tpu_custom_call.1} parent=1 // pred_region
      %s14 = ssub.s32 256, 256
      %15 = vsyncadd [#allocation3], %s14
      %s16 = sshll.u32 [#allocation2], 4
      %s17 = int_to_ptr.vmem [resolvable:$true] %s16
      %22 = dma.hbm_to_vmem [thread:$0]  %s0, 256, %s17, [#allocation3], 128, 128, 8
    $region5: #{tpu_custom_call.1} parent=1 // pred_fallthru
      _
    // Predicated region
    $region6: #{tpu_custom_call.1} parent=1 // pred_check
      _
    $region7: #{tpu_custom_call.1} parent=1 // pred_check_branch
      %24 = sbr.rel (0) target = $region9
    $region8: #{tpu_custom_call.1} parent=1 // pred_region
      %s26 = ssub.s32 128, 128
      %27 = vsyncadd [#allocation6], %s26
      %s28 = sshll.u32 [#allocation5], 4
      %s29 = int_to_ptr.vmem [resolvable:$true] %s28
      %34 = dma.hbm_to_vmem [thread:$0]  %s1, 128, %s29, [#allocation6], 64, 64, 4
    $region9: #{tpu_custom_call.1} parent=1 // pred_fallthru
      _
    // Predicated region
    $region10: #{tpu_custom_call.1} parent=1 // pred_check
      _
    $region11: #{tpu_custom_call.1} parent=1 // pred_check_branch
      %36 = sbr.rel (0) target = $region13
    $region12: #{tpu_custom_call.1} parent=1 // pred_region
      _
    $region13: #{tpu_custom_call.1} parent=1 // pred_fallthru
      _
    // Predicated region
    $region14: #{tpu_custom_call.1} parent=1 // pred_check
      _
    $region15: #{tpu_custom_call.1} parent=1 // pred_check_branch
      %38 = sbr.rel (0) target = $region17
    $region16: #{tpu_custom_call.1} parent=1 // pred_region
      %39 = dma.done [#allocation3], 256
    $region17: #{tpu_custom_call.1} parent=1 // pred_fallthru
      _
    // Predicated region
    $region18: #{tpu_custom_call.1} parent=1 // pred_check
      _
    $region19: #{tpu_custom_call.1} parent=1 // pred_check_branch
      %41 = sbr.rel (0) target = $region21
    $region20: #{tpu_custom_call.1} parent=1 // pred_region
      %42 = dma.done [#allocation6], 128
    $region21: #{tpu_custom_call.1} parent=1 // pred_fallthru
      _
    %v44 = vld [vmem:[#allocation2] sm:$0xff]
    %v45 = vld [vmem:[#allocation2 + $0x8] sm:$0xff]
    %v46 = vpack.c.bf16 %v45, %v44
    %v47 = vld [vmem:[#allocation5] sm:$0xf]
    %v48 = vld [vmem:[#allocation5 + $0x4] sm:$0xf]
    %v49 = vld [vmem:[%s2] sm:$0x1]
    %v51 = vlaneseq
    %v52 = vshrl.u32 %v51, 7
    %v53 = vsub.s32 0, %v52
    %v54 = vrot.slane %v49, %v53
    %v58 = vunpack.c.l.b16 %v47
    %v59 = vunpack.c.l.b16 %v48
    %v60 = vpack.c.b16 %v59, %v58
    %vm62 = vcmask 130048
    %v64 = vsel %vm62, %v46, 0
    %66 = vmatprep.subr.bf16.mxu0 0
    %67 = vmatpush1.bf16.msra.mxu0 %v60
    %68 = vmatprep.subr.bf16.mxu0 0
    %69 = vmatpush1.bf16.msra.mxu0 0
    %70 = vmatprep.subr.bf16.mxu0 0
    %71 = vmatpush1.bf16.msra.mxu0 0
    %72 = vmatprep.subr.bf16.mxu0 0
    %73 = vmatpush1.bf16.msra.mxu0 0
    %74 = vmatprep.subr.bf16.mxu0 0
    %75 = vmatpush1.bf16.msra.mxu0 0
    %76 = vmatprep.subr.bf16.mxu0 0
    %77 = vmatpush1.bf16.msra.mxu0 0
    %78 = vmatprep.subr.bf16.mxu0 0
    %79 = vmatpush1.bf16.msra.mxu0 0
    %80 = vmatprep.subr.bf16.mxu0 0
    %81 = vmatpush1.bf16.msra.mxu0 0
    %82 = vmatprep.subr.bf16.mxu0 0
    %83 = vmatpush1.bf16.msra.mxu0 0
    %84 = vmatprep.subr.bf16.mxu0 0
    %85 = vmatpush1.bf16.msra.mxu0 0
    %86 = vmatprep.subr.bf16.mxu0 0
    %87 = vmatpush1.bf16.msra.mxu0 0
    %88 = vmatprep.subr.bf16.mxu0 0
    %89 = vmatpush1.bf16.msra.mxu0 0
    %90 = vmatprep.subr.bf16.mxu0 0
    %91 = vmatpush1.bf16.msra.mxu0 0
    %92 = vmatprep.subr.bf16.mxu0 0
    %93 = vmatpush1.bf16.msra.mxu0 0
    %94 = vmatprep.subr.bf16.mxu0 0
    %95 = vmatpush1.bf16.msra.mxu0 0
    %96 = vmatprep.subr.bf16.mxu0 0
    %97 = vmatpush1.bf16.msra.mxu0 0
    %98 = vmatprep.mubr.bf16.mxu0 0
    %99 = vmatmul.mubr.bf16.gmra.mrb[0].mxu0 %v64
    %v100 = vpop.f32.mrb[0].mxu0
    %v101 = vadd.f32 %v54, %v100
    %v102 = vpop.f32.mrb[0].mxu0
    %v103 = vpop.f32.mrb[0].mxu0
    %v104 = vadd.f32 %v54, %v103
    %v105 = vpop.f32.mrb[0].mxu0
    %106 = vdwg.mxu0
    %107 = vst [vmem:[#allocation7] sm:$0xff] %v101
    %108 = vst [vmem:[#allocation7 + $0x8] sm:$0xff] %v104
    // Predicated region
    $region22: #{tpu_custom_call.1} parent=1 // pred_check
      _
    $region23: #{tpu_custom_call.1} parent=1 // pred_check_branch
      %110 = sbr.rel (0) target = $region25
    $region24: #{tpu_custom_call.1} parent=1 // pred_region
      %s112 = ssub.s32 256, 256
      %113 = vsyncadd [#allocation4], %s112
      %s114 = sshll.u32 [#allocation7], 4
      %s115 = int_to_ptr.vmem [resolvable:$true] %s114
      %120 = dma.vmem_to_hbm [thread:$0]  %s115, 256, %s3, [#allocation4], 128, 128, 8
    $region25: #{tpu_custom_call.1} parent=1 // pred_fallthru
      _
    // Predicated region
    $region26: #{tpu_custom_call.1} parent=1 // pred_check
      _
    $region27: #{tpu_custom_call.1} parent=1 // pred_check_branch
      %122 = sbr.rel (0) target = $region29
    $region28: #{tpu_custom_call.1} parent=1 // pred_region
      %123 = dma.done [#allocation4], 256
    $region29: #{tpu_custom_call.1} parent=1 // pred_fallthru
      _
    %124 = vsyncpa [#allocation3], 1
    %125 = vsyncpa [#allocation6], 1
    %126 = vsyncpa [#allocation4], 1

</llo_original>
